<compile_context>
chip_gen: v5e
topology: v5e:2x2
jax: 0.10.0
libtpu: 0.0.40
codegen_flags: <defaults>
</compile_context>

<pallas_src>
import functools

import jax
import jax.numpy as jnp
from jax.experimental import pallas as pl
from jax.experimental.pallas import tpu as pltpu


def _round_up(x, m):
    return ((x + m - 1) // m) * m


def _mmd_tile_kernel(bw_ref, row_ref, col_ref, out_ref, *,
                     batch, n_valid, tile, kernel_mul, kernel_num):
    """One (tile x tile) block of the signed multi-bandwidth Gaussian kernel sum.

    bw_ref : (kernel_num,) f32 in SMEM, holds -1/bandwidth_i.
    row_ref: (tile, d_pad) f32 row block of [source; target] (zero padded).
    col_ref: (tile, d_pad) f32 column block of the same array.
    out_ref: (1, 1, 128) f32 per-row-tile partial sum (scalar broadcast over
             lanes), accumulated across the column-tile grid axis.
    """
    i = pl.program_id(0)
    j = pl.program_id(1)

    x = row_ref[...]                                             # (tile, d_pad)
    y = col_ref[...]                                             # (tile, d_pad)

    # Gram block on the MXU; contract the feature (lane) axis of both operands
    # directly so no transposed copy of the column block is materialized.
    gram = jax.lax.dot_general(
        x, y, dimension_numbers=(((1,), (1,)), ((), ())),
        preferred_element_type=jnp.float32)                      # (tile, tile)

    x_sq = jnp.sum(x * x, axis=1, keepdims=True)                 # (tile, 1)
    y_sq = jnp.sum(y * y, axis=1)                                # (tile,)
    # Clamp: gram-based distances can go slightly negative from f32 cancellation.
    l2 = jnp.maximum(x_sq + y_sq[None, :] - 2.0 * gram, 0.0)     # (tile, tile)

    # Sum of Gaussian kernels; the per-bandwidth divide was hoisted to scalar
    # reciprocals (bw_ref[t] = -1/bw_t), so the N x N path is mul + exp only.
    if kernel_mul == 2.0:
        # 1 exp + (center) squarings + (kernel_num-1-center) sqrts instead of
        # kernel_num exps: bw_i = bw_0 * 2^i  =>  k_{i-1} = k_i^2, k_{i+1} = sqrt(k_i).
        center = kernel_num // 2
        base = jnp.exp(l2 * bw_ref[center])
        ksum = base
        cur = base
        for _ in range(center):                    # smaller bandwidths
            cur = cur * cur
            ksum = ksum + cur
        cur = base
        for _ in range(kernel_num - center - 1):   # larger bandwidths
            cur = jnp.sqrt(cur)
            ksum = ksum + cur
    else:
        ksum = jnp.exp(l2 * bw_ref[0])
        for t in range(1, kernel_num):
            ksum = ksum + jnp.exp(l2 * bw_ref[t])

    # Signed mask replaces the four quadrant slices + means:
    #   +1 for XX/YY, -1 for XY/YX, 0 for zero-padded rows/cols.
    gi = i * tile + jax.lax.broadcasted_iota(jnp.int32, (tile, tile), 0)
    gj = j * tile + jax.lax.broadcasted_iota(jnp.int32, (tile, tile), 1)
    same_side = (gi < batch) == (gj < batch)
    valid = (gi < n_valid) & (gj < n_valid)
    sign = jnp.where(valid, jnp.where(same_side, 1.0, -1.0), 0.0)

    contrib = jnp.sum(ksum * sign)                               # scalar

    @pl.when(j == 0)
    def _():
        out_ref[...] = jnp.zeros_like(out_ref)
    out_ref[...] += contrib


def mmd_loss_rbf(source, target, kernel_mul=2.0, kernel_num=5, fix_sigma=None,
                 max_tile=256):
    """Pallas implementation of MMD_loss(kernel_type='rbf').forward(source, target)."""
    assert source.shape == target.shape and source.ndim == 2
    batch, feat = source.shape
    n = 2 * batch

    total = jnp.concatenate([source, target], axis=0).astype(jnp.float32)
    # TODO(synk): feed source/target directly (BlockSpec-selected row blocks) to
    # skip the concat's extra HBM round trip; kept as cheap layout glue for now.

    # Closed-form bandwidth — no N x N matrix needed:
    #   sum_{ij} ||x_i - x_j||^2 = 2*N*sum_i ||x_i||^2 - 2*||sum_i x_i||^2
    sq_sum = jnp.sum(total * total)
    col_sum = jnp.sum(total, axis=0)
    l2_sum = 2.0 * n * sq_sum - 2.0 * jnp.dot(col_sum, col_sum)
    if fix_sigma is not None:
        bandwidth = jnp.asarray(fix_sigma, jnp.float32)
    else:
        bandwidth = l2_sum / float(n * n - n)
    bandwidth = bandwidth / (kernel_mul ** (kernel_num // 2))
    bw_list = bandwidth * (kernel_mul ** jnp.arange(kernel_num, dtype=jnp.float32))
    neg_inv_bw = (-1.0 / bw_list).astype(jnp.float32)            # (kernel_num,)

    # Tile sizing: lane-pad features to 128, pick the largest row/col tile that
    # keeps the double-buffered operand blocks within ~8 MiB so it fits every
    # generation's default scoped VMEM (incl. v7x's smaller VMEM).
    d_pad = _round_up(feat, 128)
    fit = max(8, ((8 << 20) // (16 * d_pad)) // 8 * 8)   # 2 operands x 2 buffers
    tile = min(int(max_tile), fit, _round_up(n, 8))
    tile = max(8, (tile // 8) * 8)
    n_pad = _round_up(n, tile)
    nr = n_pad // tile

    total_pad = jnp.pad(total, ((0, n_pad - n), (0, d_pad - feat)))

    kernel = functools.partial(
        _mmd_tile_kernel,
        batch=batch, n_valid=n, tile=tile,
        kernel_mul=float(kernel_mul), kernel_num=int(kernel_num))

    partials = pl.pallas_call(
        kernel,
        out_shape=jax.ShapeDtypeStruct((nr, 1, 128), jnp.float32),
        grid=(nr, nr),
        in_specs=[
            pl.BlockSpec(memory_space=pltpu.SMEM),                 # -1/bw_t table
            pl.BlockSpec((tile, d_pad), lambda i, j: (i, 0)),      # row block
            pl.BlockSpec((tile, d_pad), lambda i, j: (j, 0)),      # col block
        ],
        out_specs=pl.BlockSpec((1, 1, 128), lambda i, j: (i, 0, 0)),
        compiler_params=pltpu.CompilerParams(
            dimension_semantics=("parallel", "arbitrary")),
    )(neg_inv_bw, total_pad, total_pad)

    return jnp.sum(partials[:, 0, 0]) / float(batch * batch)


# TODO(synk): kernel_type='linear' branch (linear_mmd2) not implemented in Pallas;
# only the default 'rbf' forward path is covered.


def _mmd_loss_rbf_reference(source, target, kernel_mul=2.0, kernel_num=5):
    """Pure-JAX reference mirroring the PyTorch code, for a sanity check."""
    batch = source.shape[0]
    total = jnp.concatenate([source, target], axis=0).astype(jnp.float32)
    n = total.shape[0]
    diff = total[None, :, :] - total[:, None, :]
    l2 = jnp.sum(diff * diff, axis=2)
    bandwidth = jnp.sum(l2) / (n * n - n)
    bandwidth = bandwidth / (kernel_mul ** (kernel_num // 2))
    kernels = sum(jnp.exp(-l2 / (bandwidth * kernel_mul ** i)) for i in range(kernel_num))
    xx = jnp.mean(kernels[:batch, :batch])
    yy = jnp.mean(kernels[batch:, batch:])
    xy = jnp.mean(kernels[:batch, batch:])
    yx = jnp.mean(kernels[batch:, :batch])
    return xx + yy - xy - yx


if __name__ == "__main__":
    key = jax.random.PRNGKey(0)
    k_src, k_tgt = jax.random.split(key)
    # (batch, features) inputs; deliberately not multiples of 8/128 so the
    # padding + signed-mask path is exercised.
    source = jax.random.normal(k_src, (7, 33), dtype=jnp.float32)
    target = jax.random.normal(k_tgt, (7, 33), dtype=jnp.float32) + 0.5

    ref = jax.block_until_ready(_mmd_loss_rbf_reference(source, target))

    # Single-tile path (1x1 grid).
    loss = jax.block_until_ready(mmd_loss_rbf(source, target))
    assert jnp.allclose(loss, ref, rtol=1e-4, atol=1e-4), (loss, ref)

    # Multi-tile path (2x2 grid): exercises per-row-tile accumulation over the
    # "arbitrary" column axis, the "parallel" row axis, and padded-row masking.
    loss_tiled = jax.block_until_ready(mmd_loss_rbf(source, target, max_tile=8))
    assert jnp.allclose(loss_tiled, ref, rtol=1e-4, atol=1e-4), (loss_tiled, ref)

    print("KERNEL_OK")
</pallas_src>

<mosaic_0001>
module attributes {stable_mosaic.version = 11 : i64} {
  func.func @_mmd_tile_kernel(%arg0: i32, %arg1: i32, %arg2: memref<5xf32, #tpu.memory_space<smem>>, %arg3: memref<16x128xf32, #tpu.memory_space<vmem>>, %arg4: memref<16x128xf32, #tpu.memory_space<vmem>>, %arg5: memref<1x1x128xf32, #tpu.memory_space<vmem>>) attributes {dimension_semantics = [#tpu.dimension_semantics<parallel>, #tpu.dimension_semantics<arbitrary>], iteration_bounds = array<i64: 1, 1>, scalar_prefetch = 0 : i64, scratch_operands = 0 : i64, tpu.core_type = #tpu.core_type<tc>, window_params = [{transform_indices = @transform_0, window_bounds = array<i64: 5>}, {transform_indices = @transform_1, window_bounds = array<i64: 16, 128>}, {transform_indices = @transform_2, window_bounds = array<i64: 16, 128>}, {transform_indices = @transform_3, window_bounds = array<i64: 1, 1, 128>}]} {
    %c0 = arith.constant 0 : index
    %c0_0 = arith.constant 0 : index
    %0 = vector.load %arg3[%c0, %c0_0] : memref<16x128xf32, #tpu.memory_space<vmem>>, vector<16x128xf32>
    %c0_1 = arith.constant 0 : index
    %c0_2 = arith.constant 0 : index
    %1 = vector.load %arg4[%c0_1, %c0_2] : memref<16x128xf32, #tpu.memory_space<vmem>>, vector<16x128xf32>
    %cst = arith.constant dense<0.000000e+00> : vector<16x16xf32>
    %2 = tpu.matmul %0, %1, %cst {dimension_numbers = #tpu.dot_dimension_numbers<[1], [1], [0], [0], [0, 0, 1, 0], [], []>} : vector<16x128xf32>, vector<16x128xf32>, vector<16x16xf32> -> vector<16x16xf32>
    %3 = arith.mulf %0, %0 : vector<16x128xf32>
    %cst_3 = arith.constant dense<0.000000e+00> : vector<16xf32>
    %4 = vector.multi_reduction <add>, %3, %cst_3 [1] : vector<16x128xf32> to vector<16xf32>
    %5 = vector.shape_cast %4 : vector<16xf32> to vector<16x1xf32>
    %6 = arith.mulf %1, %1 : vector<16x128xf32>
    %cst_4 = arith.constant dense<0.000000e+00> : vector<16xf32>
    %7 = vector.multi_reduction <add>, %6, %cst_4 [1] : vector<16x128xf32> to vector<16xf32>
    %8 = vector.shape_cast %7 : vector<16xf32> to vector<1x16xf32>
    %9 = vector.broadcast %5 : vector<16x1xf32> to vector<16x16xf32>
    %10 = vector.broadcast %8 : vector<1x16xf32> to vector<16x16xf32>
    %11 = arith.addf %9, %10 : vector<16x16xf32>
    %cst_5 = arith.constant 2.000000e+00 : f32
    %12 = vector.broadcast %cst_5 : f32 to vector<16x16xf32>
    %13 = arith.mulf %12, %2 : vector<16x16xf32>
    %14 = arith.subf %11, %13 : vector<16x16xf32>
    %cst_6 = arith.constant 0.000000e+00 : f32
    %15 = vector.broadcast %cst_6 : f32 to vector<16x16xf32>
    %16 = arith.maximumf %14, %15 : vector<16x16xf32>
    %c2 = arith.constant 2 : index
    %17 = memref.load %arg2[%c2] : memref<5xf32, #tpu.memory_space<smem>>
    %18 = vector.broadcast %17 : f32 to vector<16x16xf32>
    %19 = arith.mulf %16, %18 : vector<16x16xf32>
    %20 = math.exp %19 : vector<16x16xf32>
    %21 = arith.mulf %20, %20 : vector<16x16xf32>
    %22 = arith.addf %20, %21 : vector<16x16xf32>
    %23 = arith.mulf %21, %21 : vector<16x16xf32>
    %24 = arith.addf %22, %23 : vector<16x16xf32>
    %25 = math.sqrt %20 : vector<16x16xf32>
    %26 = arith.addf %24, %25 : vector<16x16xf32>
    %27 = math.sqrt %25 : vector<16x16xf32>
    %28 = arith.addf %26, %27 : vector<16x16xf32>
    %c16_i32 = arith.constant 16 : i32
    %29 = arith.muli %arg0, %c16_i32 : i32
    %30 = tpu.iota {dimensions = array<i32: 0>} : vector<16x16xi32>
    %31 = vector.broadcast %29 : i32 to vector<16x16xi32>
    %32 = arith.addi %31, %30 : vector<16x16xi32>
    %c16_i32_7 = arith.constant 16 : i32
    %33 = arith.muli %arg1, %c16_i32_7 : i32
    %34 = tpu.iota {dimensions = array<i32: 1>} : vector<16x16xi32>
    %35 = vector.broadcast %33 : i32 to vector<16x16xi32>
    %36 = arith.addi %35, %34 : vector<16x16xi32>
    %c7_i32 = arith.constant 7 : i32
    %37 = vector.broadcast %c7_i32 : i32 to vector<16x16xi32>
    %38 = arith.cmpi slt, %32, %37 : vector<16x16xi32>
    %c7_i32_8 = arith.constant 7 : i32
    %39 = vector.broadcast %c7_i32_8 : i32 to vector<16x16xi32>
    %40 = arith.cmpi slt, %36, %39 : vector<16x16xi32>
    %41 = arith.xori %38, %40 : vector<16x16xi1>
    %cst_9 = arith.constant dense<true> : vector<16x16xi1>
    %42 = arith.xori %41, %cst_9 : vector<16x16xi1>
    %c14_i32 = arith.constant 14 : i32
    %43 = vector.broadcast %c14_i32 : i32 to vector<16x16xi32>
    %44 = arith.cmpi slt, %32, %43 : vector<16x16xi32>
    %c14_i32_10 = arith.constant 14 : i32
    %45 = vector.broadcast %c14_i32_10 : i32 to vector<16x16xi32>
    %46 = arith.cmpi slt, %36, %45 : vector<16x16xi32>
    %47 = arith.andi %44, %46 : vector<16x16xi1>
    %cst_11 = arith.constant 1.000000e+00 : f32
    %cst_12 = arith.constant -1.000000e+00 : f32
    %48 = vector.broadcast %cst_11 : f32 to vector<16x16xf32>
    %49 = vector.broadcast %cst_12 : f32 to vector<16x16xf32>
    %50 = arith.select %42, %48, %49 : vector<16x16xi1>, vector<16x16xf32>
    %cst_13 = arith.constant 0.000000e+00 : f32
    %51 = vector.broadcast %cst_13 : f32 to vector<16x16xf32>
    %52 = arith.select %47, %50, %51 : vector<16x16xi1>, vector<16x16xf32>
    %53 = arith.mulf %28, %52 : vector<16x16xf32>
    %54 = vector.shape_cast %53 : vector<16x16xf32> to vector<1x16x16xf32>
    %cst_14 = arith.constant dense<0.000000e+00> : vector<1xf32>
    %55 = vector.multi_reduction <add>, %54, %cst_14 [1, 2] : vector<1x16x16xf32> to vector<1xf32>
    %56 = vector.shape_cast %55 : vector<1xf32> to vector<1x1x1xf32>
    %57 = vector.extract %56[0, 0, 0] : f32 from vector<1x1x1xf32>
    %c0_i32 = arith.constant 0 : i32
    %58 = arith.cmpi eq, %arg1, %c0_i32 : i32
    %59 = arith.extui %58 : i1 to i32
    %c0_i32_15 = arith.constant 0 : i32
    %60 = arith.cmpi ne, %59, %c0_i32_15 : i32
    scf.if %60 {
      %cst_22 = arith.constant 0.000000e+00 : f32
      %65 = vector.broadcast %cst_22 : f32 to vector<1x1x128xf32>
      %c0_23 = arith.constant 0 : index
      %c0_24 = arith.constant 0 : index
      %c0_25 = arith.constant 0 : index
      %66 = vector.load %arg5[%c0_23, %c0_24, %c0_25] : memref<1x1x128xf32, #tpu.memory_space<vmem>>, vector<1x1x128xf32>
      tpu.vector_store %arg5[%c0_23, %c0_24, %c0_25], %65 {strides = array<i32>} : memref<1x1x128xf32, #tpu.memory_space<vmem>>, vector<1x1x128xf32>,
    } else {
    }
    %c0_16 = arith.constant 0 : index
    %c0_17 = arith.constant 0 : index
    %c0_18 = arith.constant 0 : index
    %61 = vector.load %arg5[%c0_16, %c0_17, %c0_18] : memref<1x1x128xf32, #tpu.memory_space<vmem>>, vector<1x1x128xf32>
    %62 = vector.broadcast %57 : f32 to vector<1x1x128xf32>
    %63 = arith.addf %61, %62 : vector<1x1x128xf32>
    %c0_19 = arith.constant 0 : index
    %c0_20 = arith.constant 0 : index
    %c0_21 = arith.constant 0 : index
    %64 = vector.load %arg5[%c0_19, %c0_20, %c0_21] : memref<1x1x128xf32, #tpu.memory_space<vmem>>, vector<1x1x128xf32>
    tpu.vector_store %arg5[%c0_19, %c0_20, %c0_21], %63 {strides = array<i32>} : memref<1x1x128xf32, #tpu.memory_space<vmem>>, vector<1x1x128xf32>,
    return
  }
  func.func @transform_0(%arg0: i32, %arg1: i32) -> i32 {
    %c0_i32 = arith.constant 0 : i32
    %c0_i32_0 = arith.constant 0 : i32
    return %c0_i32 : i32
  }
  func.func @transform_1(%arg0: i32, %arg1: i32) -> (i32, i32) {
    %c0_i32 = arith.constant 0 : i32
    %c0_i32_0 = arith.constant 0 : i32
    return %arg0, %c0_i32 : i32, i32
  }
  func.func @transform_2(%arg0: i32, %arg1: i32) -> (i32, i32) {
    %c0_i32 = arith.constant 0 : i32
    %c0_i32_0 = arith.constant 0 : i32
    return %arg1, %c0_i32 : i32, i32
  }
  func.func @transform_3(%arg0: i32, %arg1: i32) -> (i32, i32, i32) {
    %c0_i32 = arith.constant 0 : i32
    %c0_i32_0 = arith.constant 0 : i32
    %c0_i32_1 = arith.constant 0 : i32
    return %arg0, %c0_i32, %c0_i32_0 : i32, i32, i32
  }
}

</mosaic_0001>

<llo_original>
// kernel: tpu_custom_call.1
$region0: #{tpu_custom_call.1}
  #allocation0 [shape = 'u32[]', space=smem, size = 0x4, offset = 0x4, fixed_abs, tag = 'smem constant byte address 0x4 - core index']
  #allocation1 [shape = 'u32[72,128]{1,0:T(1,128)}', space=vmem, size = 0x9000, scoped, tag = 'internal scratch']
  %s0 = inlined_call_operand.hbm [shape: f32[5], index: 0, kind: input, shape index: {}]
  %s1 = inlined_call_operand.hbm [shape: f32[16,128], index: 1, kind: input, shape index: {}]
  %s2 = inlined_call_operand.hbm [shape: f32[16,128], index: 2, kind: input, shape index: {}]
  %s3 = inlined_call_operand.hbm [shape: f32[1,1,128], index: 3, kind: output, shape index: {}]
  %s4 = sld [smem:[#allocation0]]
  $region38: #{tpu_custom_call.1} parent=0
    _
  %s6 = ssub.s32 1, %s4
  %s7 = scalar_select 0, %s6, %s4
  $region1: #{tpu_custom_call.1} parent=0
    #allocation2 [shape = 'u8[512]{0}', space=smem, size = 0x200, scoped, tag = 'input window, operand 0, single buffered']
    #allocation3 [shape = 's32[1]{0}', space=sflag, size = 0x4, scoped, tag = 'scoped memory for tpu_custom_call.1']
    #allocation4 [shape = 's32[1]{0}', space=sflag, size = 0x4, scoped, tag = 'scoped memory for tpu_custom_call.1']
    #allocation5 [shape = 's32[1]{0}', space=sflag, size = 0x4, scoped, tag = 'scoped memory for tpu_custom_call.1']
    #allocation6 [shape = 'u8[8192]{0}', space=vmem, size = 0x2000, scoped, tag = 'input window, operand 1, single buffered']
    #allocation7 [shape = 'u8[8192]{0}', space=vmem, size = 0x2000, scoped, tag = 'input window, operand 2, single buffered']
    #allocation8 [shape = 's32[1]{0}', space=sflag, size = 0x4, scoped, tag = 'scoped memory for tpu_custom_call.1']
    #allocation9 [shape = 'u8[512]{0}', space=vmem, size = 0x400, scoped, tag = 'output window, operand 0, single buffered']
    %8 = vsyncpa [#allocation5], 0
    %9 = vsyncpa [#allocation3], 0
    %10 = vsyncpa [#allocation8], 0
    %11 = vsyncpa [#allocation4], 0
    // Predicated region
    $region2: #{tpu_custom_call.1} parent=1 // pred_check
      _
    $region3: #{tpu_custom_call.1} parent=1 // pred_check_branch
      %13 = sbr.rel (0) target = $region5
    $region4: #{tpu_custom_call.1} parent=1 // pred_region
      %15 = vsyncadd [#allocation5], 0
      %s17 = sshll.u32 %s0, 4
      %s18 = int_to_ptr.hbm [resolvable:$true] %s17
      %20 = dma.hbm_to_smem %s18, 16, [#allocation2], [#allocation5]
    $region5: #{tpu_custom_call.1} parent=1 // pred_fallthru
      _
    // Predicated region
    $region6: #{tpu_custom_call.1} parent=1 // pred_check
      _
    $region7: #{tpu_custom_call.1} parent=1 // pred_check_branch
      %22 = sbr.rel (0) target = $region9
    $region8: #{tpu_custom_call.1} parent=1 // pred_region
      %24 = vsyncadd [#allocation3], 0
      %s25 = sshll.u32 %s1, 4
      %s26 = int_to_ptr.hbm [resolvable:$true] %s25
      %s27 = sshll.u32 [#allocation6], 4
      %s28 = int_to_ptr.vmem [resolvable:$true] %s27
      %33 = dma.hbm_to_vmem [thread:$0]  %s26, 256, %s28, [#allocation3], 128, 128, 8
    $region9: #{tpu_custom_call.1} parent=1 // pred_fallthru
      _
    // Predicated region
    $region10: #{tpu_custom_call.1} parent=1 // pred_check
      _
    $region11: #{tpu_custom_call.1} parent=1 // pred_check_branch
      %35 = sbr.rel (0) target = $region13
    $region12: #{tpu_custom_call.1} parent=1 // pred_region
      %37 = vsyncadd [#allocation8], 0
      %s38 = sshll.u32 %s2, 4
      %s39 = int_to_ptr.hbm [resolvable:$true] %s38
      %s40 = sshll.u32 [#allocation7], 4
      %s41 = int_to_ptr.vmem [resolvable:$true] %s40
      %46 = dma.hbm_to_vmem [thread:$0]  %s39, 256, %s41, [#allocation8], 128, 128, 8
    $region13: #{tpu_custom_call.1} parent=1 // pred_fallthru
      _
    // Predicated region
    $region14: #{tpu_custom_call.1} parent=1 // pred_check
      _
    $region15: #{tpu_custom_call.1} parent=1 // pred_check_branch
      %48 = sbr.rel (0) target = $region17
    $region16: #{tpu_custom_call.1} parent=1 // pred_region
      %50 = dma.done [#allocation5], 16
    $region17: #{tpu_custom_call.1} parent=1 // pred_fallthru
      _
    // Predicated region
    $region18: #{tpu_custom_call.1} parent=1 // pred_check
      _
    $region19: #{tpu_custom_call.1} parent=1 // pred_check_branch
      %52 = sbr.rel (0) target = $region21
    $region20: #{tpu_custom_call.1} parent=1 // pred_region
      %54 = dma.done [#allocation3], 256
    $region21: #{tpu_custom_call.1} parent=1 // pred_fallthru
      _
    // Predicated region
    $region22: #{tpu_custom_call.1} parent=1 // pred_check
      _
    $region23: #{tpu_custom_call.1} parent=1 // pred_check_branch
      %56 = sbr.rel (0) target = $region25
    $region24: #{tpu_custom_call.1} parent=1 // pred_region
      %58 = dma.done [#allocation8], 256
    $region25: #{tpu_custom_call.1} parent=1 // pred_fallthru
      _
    %59 = sfence
    %v60 = vld [vmem:[#allocation6] sm:$0xff]
    %v61 = vld [vmem:[#allocation6 + $0x8] sm:$0xff]
    %v62 = vld [vmem:[#allocation7] sm:$0xff]
    %v63 = vld [vmem:[#allocation7 + $0x8] sm:$0xff]
    %64 = vmatpush.xpose.msra.mxu0 0.0
    %65 = vmatpush.xpose.msra.mxu0 0.0
    %66 = vmatpush.xpose.msra.mxu0 0.0
    %67 = vmatpush.xpose.msra.mxu0 0.0
    %68 = vmatpush.xpose.msra.mxu0 0.0
    %69 = vmatpush.xpose.msra.mxu0 0.0
    %70 = vmatpush.xpose.msra.mxu0 0.0
    %71 = vmatpush.xpose.msra.mxu0 0.0
    %72 = vmatpush.xpose.msra.mxu0 0.0
    %73 = vmatpush.xpose.msra.mxu0 0.0
    %74 = vmatpush.xpose.msra.mxu0 0.0
    %75 = vmatpush.xpose.msra.mxu0 0.0
    %76 = vmatpush.xpose.msra.mxu0 0.0
    %77 = vmatpush.xpose.msra.mxu0 0.0
    %78 = vmatpush.xpose.msra.mxu0 %v63
    %79 = vmatpush.xpose.msra.mxu0 %v62
    %80 = vmatmul.f32.gmra.mxu0 %v60
    %v81 = vpop.f32.mrf.mxu0
    %v82 = vadd.f32 0.0, %v81
    %83 = vmatmul.f32.gmra.mxu0 %v61
    %v84 = vpop.f32.mrf.mxu0
    %v85 = vadd.f32 0.0, %v84
    %86 = vdwg.mxu0
    %v87 = vmul.f32 %v60, %v60
    %v88 = vmul.f32 %v61, %v61
    %89 = vadd.xlane.f32.xlu0 %v87
    %v90 = vpop.xlane.xlu0 %89
    %91 = vadd.xlane.f32.xlu0 %v88
    %v92 = vpop.xlane.xlu0 %91
    %v93 = vmul.f32 %v62, %v62
    %v94 = vmul.f32 %v63, %v63
    %95 = vadd.xlane.f32.xlu0 %v93
    %v96 = vpop.xlane.xlu0 %95
    %97 = vadd.xlane.f32.xlu0 %v94
    %v98 = vpop.xlane.xlu0 %97
    %v101 = vlaneseq
    %v102 = vand.u32 %v101, 127
    %v103 = vperm.slane %v96, %v102
    %v104 = vadd.s32 %v102, 4294967288
    %v105 = vperm.slane %v98, %v104
    %vm106 = vcmask 130112
    %v107 = vsel %vm106, %v105, %v103
    %vm108 = vcmask 1042434
    %v109 = vsel %vm108, %v107, %v107
    %vm110 = vcmask 1043459
    %v111 = vsel %vm110, %v107, %v109
    %vm112 = vcmask 1044484
    %v113 = vsel %vm112, %v107, %v111
    %vm114 = vcmask 1045509
    %v115 = vsel %vm114, %v107, %v113
    %vm116 = vcmask 1046534
    %v117 = vsel %vm116, %v107, %v115
    %vm118 = vcmask 1047559
    %v119 = vsel %vm118, %v107, %v117
    %v121 = vadd.f32 %v90, %v119
    %v122 = vadd.f32 %v92, %v119
    %v123 = vmul.f32 %v82, 2.0
    %v124 = vmul.f32 %v85, 2.0
    %v125 = vsub.f32 %v121, %v123
    %v126 = vsub.f32 %v122, %v124
    %v127 = vmax.f32 %v125, 0.0
    %v128 = vmax.f32 %v126, 0.0
    %s129 = sld [smem:[#allocation2 + $0x2]]
    %v130 = vstv %s129
    %v131 = vmul.f32 %v127, %v130
    %v132 = vmul.f32 %v128, %v130
    %v133 = vmul.f32 %v131, 1.442695
    %v134 = vpow.pop %v133
    %v135 = vmul.f32 %v132, 1.442695
    %v136 = vpow.pop %v135
    %v137 = vmul.f32 %v134, %v134
    %v138 = vmul.f32 %v136, %v136
    %v139 = vadd.f32 %v134, %v137
    %v140 = vadd.f32 %v136, %v138
    %v141 = vmul.f32 %v137, %v137
    %v142 = vmul.f32 %v138, %v138
    %v143 = vadd.f32 %v139, %v141
    %v144 = vadd.f32 %v140, %v142
    %v145 = vrsqrt.pop %v134
    %v146 = vmul.f32 %v145, %v134
    %v147 = vmul.f32 %v146, %v145
    %v148 = vmul.f32 0.5, %v147
    %v149 = vsub.f32 1.5, %v148
    %v150 = vmul.f32 %v145, %v149
    %v151 = vmul.f32 %v134, %v150
    %vm152 = vcmp.eq.f32.partialorder %v134, inf
    %v153 = vsel %vm152, %v134, %v151
    %vm154 = vcmp.eq.f32.partialorder %v134, 0.0
    %v155 = vand.u32 %v134, 2147483648
    %v156 = vsel %vm154, %v155, %v153
    %v157 = vrsqrt.pop %v136
    %v158 = vmul.f32 %v157, %v136
    %v159 = vmul.f32 %v158, %v157
    %v160 = vmul.f32 0.5, %v159
    %v161 = vsub.f32 1.5, %v160
    %v162 = vmul.f32 %v157, %v161
    %v163 = vmul.f32 %v136, %v162
    %vm164 = vcmp.eq.f32.partialorder %v136, inf
    %v165 = vsel %vm164, %v136, %v163
    %vm166 = vcmp.eq.f32.partialorder %v136, 0.0
    %v167 = vand.u32 %v136, 2147483648
    %v168 = vsel %vm166, %v167, %v165
    %v169 = vadd.f32 %v143, %v156
    %v170 = vadd.f32 %v144, %v168
    %v171 = vrsqrt.pop %v156
    %v172 = vmul.f32 %v171, %v156
    %v173 = vmul.f32 %v172, %v171
    %v174 = vmul.f32 0.5, %v173
    %v175 = vsub.f32 1.5, %v174
    %v176 = vmul.f32 %v171, %v175
    %v177 = vmul.f32 %v156, %v176
    %vm178 = vcmp.eq.f32.partialorder %v156, inf
    %v179 = vsel %vm178, %v156, %v177
    %vm180 = vcmp.eq.f32.partialorder %v156, 0.0
    %v181 = vand.u32 %v156, 2147483648
    %v182 = vsel %vm180, %v181, %v179
    %v183 = vrsqrt.pop %v168
    %v184 = vmul.f32 %v183, %v168
    %v185 = vmul.f32 %v184, %v183
    %v186 = vmul.f32 0.5, %v185
    %v187 = vsub.f32 1.5, %v186
    %v188 = vmul.f32 %v183, %v187
    %v189 = vmul.f32 %v168, %v188
    %vm190 = vcmp.eq.f32.partialorder %v168, inf
    %v191 = vsel %vm190, %v168, %v189
    %vm192 = vcmp.eq.f32.partialorder %v168, 0.0
    %v193 = vand.u32 %v168, 2147483648
    %v194 = vsel %vm192, %v193, %v191
    %v195 = vadd.f32 %v169, %v182
    %v196 = vadd.f32 %v170, %v194
    %s197 = smul.u32 0, 16
    %v198 = vlaneseq
    %v199 = vshrl.u32 %v198, 7
    %v200 = vadd.s32 %v199, 8
    %v201 = vstv %s197
    %v202 = vadd.s32 %v201, %v199
    %v203 = vadd.s32 %v201, %v200
    %s204 = smul.u32 0, 16
    %v205 = vstv %s204
    %v206 = vadd.s32 %v205, %v102
    %vm207 = vcmp.lt.s32.totalorder %v202, 7
    %vm208 = vcmp.lt.s32.totalorder %v203, 7
    %vm209 = vcmp.lt.s32.totalorder %v206, 7
    %vm210 = vmxor %vm207, %vm209
    %vm211 = vmxor %vm208, %vm209
    %vm212 = vmxor %vm210, 1
    %vm213 = vmxor %vm211, 1
    %vm214 = vcmp.lt.s32.totalorder %v202, 14
    %vm215 = vcmp.lt.s32.totalorder %v203, 14
    %vm216 = vcmp.lt.s32.totalorder %v206, 14
    %vm217 = vmand %vm214, %vm216
    %vm218 = vmand %vm215, %vm216
    %v219 = vsel %vm212, 1.0, -1.0
    %v220 = vsel %vm213, 1.0, -1.0
    %v221 = vsel %vm217, %v219, 0.0
    %v222 = vsel %vm218, %v220, 0.0
    %v223 = vmul.f32 %v195, %v221
    %v224 = vmul.f32 %v196, %v222
    %vm225 = vcmask 130048
    %v226 = vsel %vm225, %v223, 0.0
    %v227 = vsel %vm225, %v224, 0.0
    %v228 = vadd.f32 %v226, %v227
    %229 = vadd.xlane.f32.xlu0 %v228
    %v230 = vpop.xlane.xlu0 %229
    %v231 = vrot.slane %v230, 4
    %v232 = vadd.f32 %v230, %v231
    %v233 = vrot.slane %v232, 2
    %v234 = vadd.f32 %v232, %v233
    %v235 = vrot.slane %v234, 1
    %v236 = vadd.f32 %v234, %v235
    %s237 = vtos %v236
    %p238 = scmp.eq.s32.totalorder 0, 0
    // Predicated region
    $region26: #{tpu_custom_call.1} parent=1 // pred_check
      %p239 = pneg %p238
    $region27: #{tpu_custom_call.1} parent=1 // pred_check_branch
      %241 = sbr.rel (%p239) target = $region29
    $region28: #{tpu_custom_call.1} parent=1 // pred_region
      %242 = vst [vmem:[#allocation9] sm:$0x1] 0.0
    $region29: #{tpu_custom_call.1} parent=1 // pred_fallthru
      _
    %v243 = vld [vmem:[#allocation9] sm:$0x1]
    %v244 = vstv %s237
    %v245 = vadd.f32 %v243, %v244
    %246 = vst [vmem:[#allocation9] sm:$0x1] %v245
    // Predicated region
    $region30: #{tpu_custom_call.1} parent=1 // pred_check
      _
    $region31: #{tpu_custom_call.1} parent=1 // pred_check_branch
      %248 = sbr.rel (0) target = $region33
    $region32: #{tpu_custom_call.1} parent=1 // pred_region
      %250 = vsyncadd [#allocation4], 0
      %s252 = sshll.u32 [#allocation9], 4
      %s253 = int_to_ptr.vmem [resolvable:$true] %s252
      %s254 = sshll.u32 %s3, 4
      %s255 = int_to_ptr.hbm [resolvable:$true] %s254
      %257 = dma.vmem_to_hbm [thread:$0]  %s253, 16, %s255, [#allocation4]
    $region33: #{tpu_custom_call.1} parent=1 // pred_fallthru
      _
    // Predicated region
    $region34: #{tpu_custom_call.1} parent=1 // pred_check
      _
    $region35: #{tpu_custom_call.1} parent=1 // pred_check_branch
      %259 = sbr.rel (0) target = $region37
    $region36: #{tpu_custom_call.1} parent=1 // pred_region
      %261 = dma.done [#allocation4], 16
    $region37: #{tpu_custom_call.1} parent=1 // pred_fallthru
      _
    %262 = vsyncpa [#allocation3], 1
    %263 = vsyncpa [#allocation8], 1
    %264 = vsyncpa [#allocation4], 1
    %265 = vsyncpa [#allocation5], 1

</llo_original>
